<compile_context>
chip_gen: v7x
topology: tpu7x:2x2x1
jax: 0.10.0
libtpu: 0.0.40
codegen_flags: <defaults>
</compile_context>

<pallas_src>
import math

import jax
import jax.numpy as jnp
from jax.experimental import pallas as pl
from jax.experimental.pallas import tpu as pltpu


D_MODEL = 256    # matches the PyTorch module's d_model=256 (lane-aligned: 2*128)
MAX_LEN = 64     # small stand-in for max_len=5000 in the demo

# Cap on the unrolled in-kernel gather (rows copied per sequence tile).
_GATHER_MAX_SEQ_TILE = 512


def build_sinusoidal_encoding(max_len: int, d_model: int) -> jnp.ndarray:
    """Deterministic parameter init, identical math to the PyTorch __init__."""
    position = jnp.arange(0, max_len, dtype=jnp.float32)[:, None]             # (L, 1)
    div_term = jnp.exp(
        jnp.arange(0, d_model, 2, dtype=jnp.float32)
        * -(math.log(10000.0) / d_model)
    )                                                                          # (D/2,)
    enc = jnp.zeros((max_len, d_model), dtype=jnp.float32)
    enc = enc.at[:, 0::2].set(jnp.sin(position * div_term))
    enc = enc.at[:, 1::2].set(jnp.cos(position * div_term))
    return enc                                                                 # (L, D)


# ----------------------------------------------------------------------------
# Kernels
# ----------------------------------------------------------------------------

def _add_pregathered_kernel(x_ref, enc_ref, o_ref):
    # x_ref: (tb, ts, D), enc_ref: (ts, D) -> broadcasts over the batch dim.
    o_ref[...] = x_ref[...] + enc_ref[...]


def _add_fused_gather_kernel(pos_ref, x_ref, table_ref, o_ref, gbuf_ref):
    # Grid = (S // ts, B // tb): sequence OUTER (axis 0), batch INNER (axis 1).
    #   pos_ref:   (S,) int32 in SMEM (scalar prefetch)
    #   x_ref:     (tb, ts, D) current tile of x
    #   table_ref: (max_len, D) full encoding table, resident in VMEM
    #   o_ref:     (tb, ts, D)
    #   gbuf_ref:  (ts, D) scratch holding the gathered rows for this seq tile
    si = pl.program_id(0)
    bi = pl.program_id(1)
    ts = gbuf_ref.shape[0]

    # Gather the ts positional rows once per sequence tile (at the first batch
    # step); the scratch persists across the inner batch steps.  Source rows
    # use dynamic sublane-offset loads; destinations are static row stores.
    @pl.when(bi == 0)
    def _gather():
        base = si * ts
        for k in range(ts):                       # static unroll (ts <= 512)
            p = pos_ref[base + k]                 # scalar read from SMEM
            gbuf_ref[pl.ds(k, 1), :] = table_ref[pl.ds(p, 1), :]

    # Pure VPU streaming add; (ts, D) broadcasts over the batch tile.
    o_ref[...] = x_ref[...] + gbuf_ref[...]


# ----------------------------------------------------------------------------
# Tile / VMEM sizing policy (chip-derived)
# ----------------------------------------------------------------------------

def _divisors(n: int):
    return [d for d in range(1, n + 1) if n % d == 0]


def _vmem_budget_bytes() -> int:
    """~3/4 of the chip's physical VMEM (v7x: ~48 MiB, v5e/v6e: ~96 MiB)."""
    try:
        cap = int(pltpu.get_tpu_info().vmem_capacity_bytes)
    except Exception:
        cap = 64 * 1024 * 1024   # conservative (v7x-sized) fallback
    return (cap * 3) // 4


def _choose_tiles(B, S, D, itemsize, table_bytes, fuse, vmem_budget,
                  *, max_seq_tile=None, min_steps=4,
                  target_step_bytes=4 * 1024 * 1024):
    """Pick (tb, ts): >= min_steps grid steps if possible, big per-step bytes,
    double-buffered footprint under the chip-derived VMEM budget."""
    ts_cands = sorted(d for d in _divisors(S) if d % 8 == 0) or [S]
    if max_seq_tile is not None:
        ts_cands = [t for t in ts_cands if t <= max_seq_tile] or ts_cands[:1]
    tb_cands = sorted(_divisors(B))

    max_steps = (B // min(tb_cands)) * (S // min(ts_cands))
    want_steps = min(min_steps, max_steps)

    best_key, best_tb, best_ts = None, min(tb_cands), min(ts_cands)
    for tb in tb_cands:
        for ts in ts_cands:
            steps = (B // tb) * (S // ts)
            x_blk = tb * ts * D * itemsize          # one x block (== one out block)
            enc_blk = ts * D * itemsize             # enc tile / gather scratch
            if fuse:
                need = 4 * x_blk + 2 * table_bytes + enc_blk
            else:
                need = 4 * x_blk + 2 * enc_blk
            if need > vmem_budget:
                continue
            step_bytes = 2 * x_blk                  # HBM bytes moved per step
            key = (steps >= want_steps,             # enough steps to pipeline
                   min(step_bytes, target_step_bytes),
                   steps,                           # then prefer more steps
                   step_bytes)
            if best_key is None or key > best_key:
                best_key, best_tb, best_ts = key, tb, ts
    return best_tb, best_ts


# ----------------------------------------------------------------------------
# Wrapper
# ----------------------------------------------------------------------------

def dynamic_positional_encoding(x: jnp.ndarray,
                                positions: jnp.ndarray,
                                encoding: jnp.ndarray,
                                *,
                                seq_tile: int | None = None,
                                batch_tile: int | None = None,
                                fuse_gather: bool | None = None) -> jnp.ndarray:
    """x: (B, S, D), positions: (S,) int32, encoding: (max_len, D)."""
    B, S, D = x.shape
    max_len, d_enc = encoding.shape
    assert d_enc == D
    itemsize = jnp.dtype(x.dtype).itemsize

    # Clamp out-of-range positions (matches jnp.take semantics; also protects
    # the in-kernel VMEM gather from OOB reads).
    # TODO(synk): PyTorch advanced indexing would raise on out-of-range
    # positions instead of clamping.
    positions = jnp.clip(positions.astype(jnp.int32), 0, max_len - 1)
    encoding = encoding.astype(x.dtype)
    table_bytes = max_len * D * itemsize

    budget = _vmem_budget_bytes()

    fuse = fuse_gather
    if fuse is None:
        # Fusing only pays when the extra (S, D) HBM round trip of the XLA
        # pre-gather is a noticeable fraction of the 2*B*S*D streaming traffic
        # (small B) and the full table fits comfortably in VMEM.
        fuse = (B <= 16) and (2 * table_bytes <= budget // 3)

    tb_auto, ts_auto = _choose_tiles(
        B, S, D, itemsize, table_bytes, fuse, budget,
        max_seq_tile=_GATHER_MAX_SEQ_TILE if fuse else None)

    ts = ts_auto if seq_tile is None else int(seq_tile)
    tb = tb_auto if batch_tile is None else int(batch_tile)

    if S % ts != 0 or (ts % 8 != 0 and ts != S):
        raise ValueError(
            f"seq_tile={ts} must divide S={S} and be a multiple of 8 "
            f"(or equal to S).")
    if B % tb != 0:
        raise ValueError(f"batch_tile={tb} must divide B={B}.")
    if fuse and ts > _GATHER_MAX_SEQ_TILE:
        fuse = False   # unrolled in-kernel gather would be too large

    # Precise scoped-VMEM request: double-buffered x/out blocks + encoding
    # blocks (or resident table + gather scratch) + ~2 MiB headroom.
    x_blk = tb * ts * D * itemsize
    enc_blk = ts * D * itemsize
    if fuse:
        need = 4 * x_blk + 2 * table_bytes + enc_blk
    else:
        need = 4 * x_blk + 2 * enc_blk
    vmem_limit = int(min(budget, max(need + 2 * 1024 * 1024, 8 * 1024 * 1024)))

    grid = (S // ts, B // tb)   # sequence outer, batch inner

    if fuse:
        grid_spec = pltpu.PrefetchScalarGridSpec(
            num_scalar_prefetch=1,                       # positions -> SMEM
            grid=grid,
            in_specs=[
                pl.BlockSpec((tb, ts, D), lambda si, bi, pos: (bi, si, 0)),
                # Full encoding table, same block every step -> DMA'd once,
                # stays resident in VMEM.
                pl.BlockSpec((max_len, D), lambda si, bi, pos: (0, 0)),
            ],
            out_specs=pl.BlockSpec((tb, ts, D), lambda si, bi, pos: (bi, si, 0)),
            scratch_shapes=[pltpu.VMEM((ts, D), x.dtype)],
        )
        return pl.pallas_call(
            _add_fused_gather_kernel,
            out_shape=jax.ShapeDtypeStruct((B, S, D), x.dtype),
            grid_spec=grid_spec,
            compiler_params=pltpu.CompilerParams(
                # batch axis reuses the gather scratch -> keep it sequential.
                dimension_semantics=("parallel", "arbitrary"),
                vmem_limit_bytes=vmem_limit,
            ),
        )(positions, x, encoding)

    # Fallback: one dense XLA gather, then a tiled streaming add.
    enc = jnp.take(encoding, positions, axis=0)          # (S, D)
    return pl.pallas_call(
        _add_pregathered_kernel,
        out_shape=jax.ShapeDtypeStruct((B, S, D), x.dtype),
        grid=grid,
        in_specs=[
            pl.BlockSpec((tb, ts, D), lambda si, bi: (bi, si, 0)),
            # enc block depends only on si; with batch inner, the unchanged
            # block index skips the re-DMA across batch steps.
            pl.BlockSpec((ts, D), lambda si, bi: (si, 0)),
        ],
        out_specs=pl.BlockSpec((tb, ts, D), lambda si, bi: (bi, si, 0)),
        compiler_params=pltpu.CompilerParams(
            dimension_semantics=("parallel", "parallel"),
            vmem_limit_bytes=vmem_limit,
        ),
    )(x, enc)


if __name__ == "__main__":
    key = jax.random.PRNGKey(0)
    kx, kp = jax.random.split(key)

    B, S, D = 2, 32, D_MODEL
    x = jax.random.normal(kx, (B, S, D), dtype=jnp.float32)
    positions = jax.random.randint(kp, (S,), 0, MAX_LEN, dtype=jnp.int32)
    encoding = build_sinusoidal_encoding(MAX_LEN, D)

    # Pure-JAX reference: x + encoding[None][:, positions]
    ref = x + encoding[positions][None, :, :]

    # Default (auto) path: small B -> fused in-kernel gather, multi-step grid.
    out_fused = jax.block_until_ready(
        dynamic_positional_encoding(x, positions, encoding))
    assert out_fused.shape == (B, S, D)
    assert jnp.allclose(out_fused, ref, atol=1e-6, rtol=1e-6)

    # Pre-gathered fallback path with explicit tiling (exercises the other
    # kernel + the seq/batch tiling checks): grid = (4, 2).
    out_pre = jax.block_until_ready(
        dynamic_positional_encoding(x, positions, encoding,
                                    seq_tile=8, batch_tile=1,
                                    fuse_gather=False))
    assert jnp.allclose(out_pre, ref, atol=1e-6, rtol=1e-6)

    print("KERNEL_OK")
</pallas_src>

<mosaic_0001>
module attributes {stable_mosaic.version = 11 : i64} {
  func.func @_add_fused_gather_kernel(%arg0: i32, %arg1: i32, %arg2: memref<32xi32, #tpu.memory_space<smem>>, %arg3: memref<1x16x256xf32, #tpu.memory_space<vmem>>, %arg4: memref<64x256xf32, #tpu.memory_space<vmem>>, %arg5: memref<1x16x256xf32, #tpu.memory_space<vmem>>, %arg6: memref<16x256xf32, #tpu.memory_space<vmem>>) attributes {dimension_semantics = [#tpu.dimension_semantics<parallel>, #tpu.dimension_semantics<arbitrary>], iteration_bounds = array<i64: 2, 2>, scalar_prefetch = 1 : i64, scratch_operands = 1 : i64, tpu.core_type = #tpu.core_type<tc>, window_params = [{transform_indices = @transform_0, window_bounds = array<i64: 1, 16, 256>}, {pipeline_mode = #tpu.pipeline_mode<synchronous>, transform_indices = @transform_1, window_bounds = array<i64: 64, 256>}, {transform_indices = @transform_2, window_bounds = array<i64: 1, 16, 256>}]} {
    %c0_i32 = arith.constant 0 : i32
    %0 = arith.cmpi eq, %arg1, %c0_i32 : i32
    %1 = arith.extui %0 : i1 to i32
    %c0_i32_0 = arith.constant 0 : i32
    %2 = arith.cmpi ne, %1, %c0_i32_0 : i32
    scf.if %2 {
      %c16_i32 = arith.constant 16 : i32
      %8 = arith.muli %arg0, %c16_i32 : i32
      %c0_i32_8 = arith.constant 0 : i32
      %9 = arith.addi %8, %c0_i32_8 : i32
      %10 = arith.index_cast %9 : i32 to index
      %11 = memref.load %arg2[%10] : memref<32xi32, #tpu.memory_space<smem>>
      %12 = arith.index_cast %11 : i32 to index
      %c0_9 = arith.constant 0 : index
      %13 = vector.load %arg4[%12, %c0_9] : memref<64x256xf32, #tpu.memory_space<vmem>>, vector<1x256xf32>
      %c0_10 = arith.constant 0 : index
      %c0_11 = arith.constant 0 : index
      %14 = vector.load %arg6[%c0_10, %c0_11] : memref<16x256xf32, #tpu.memory_space<vmem>>, vector<1x256xf32>
      tpu.vector_store %arg6[%c0_10, %c0_11], %13 {strides = array<i32>} : memref<16x256xf32, #tpu.memory_space<vmem>>, vector<1x256xf32>,
      %c1_i32 = arith.constant 1 : i32
      %15 = arith.addi %8, %c1_i32 : i32
      %16 = arith.index_cast %15 : i32 to index
      %17 = memref.load %arg2[%16] : memref<32xi32, #tpu.memory_space<smem>>
      %18 = arith.index_cast %17 : i32 to index
      %c0_12 = arith.constant 0 : index
      %19 = vector.load %arg4[%18, %c0_12] : memref<64x256xf32, #tpu.memory_space<vmem>>, vector<1x256xf32>
      %c1 = arith.constant 1 : index
      %c0_13 = arith.constant 0 : index
      %20 = vector.load %arg6[%c1, %c0_13] : memref<16x256xf32, #tpu.memory_space<vmem>>, vector<1x256xf32>
      tpu.vector_store %arg6[%c1, %c0_13], %19 {strides = array<i32>} : memref<16x256xf32, #tpu.memory_space<vmem>>, vector<1x256xf32>,
      %c2_i32 = arith.constant 2 : i32
      %21 = arith.addi %8, %c2_i32 : i32
      %22 = arith.index_cast %21 : i32 to index
      %23 = memref.load %arg2[%22] : memref<32xi32, #tpu.memory_space<smem>>
      %24 = arith.index_cast %23 : i32 to index
      %c0_14 = arith.constant 0 : index
      %25 = vector.load %arg4[%24, %c0_14] : memref<64x256xf32, #tpu.memory_space<vmem>>, vector<1x256xf32>
      %c2 = arith.constant 2 : index
      %c0_15 = arith.constant 0 : index
      %26 = vector.load %arg6[%c2, %c0_15] : memref<16x256xf32, #tpu.memory_space<vmem>>, vector<1x256xf32>
      tpu.vector_store %arg6[%c2, %c0_15], %25 {strides = array<i32>} : memref<16x256xf32, #tpu.memory_space<vmem>>, vector<1x256xf32>,
      %c3_i32 = arith.constant 3 : i32
      %27 = arith.addi %8, %c3_i32 : i32
      %28 = arith.index_cast %27 : i32 to index
      %29 = memref.load %arg2[%28] : memref<32xi32, #tpu.memory_space<smem>>
      %30 = arith.index_cast %29 : i32 to index
      %c0_16 = arith.constant 0 : index
      %31 = vector.load %arg4[%30, %c0_16] : memref<64x256xf32, #tpu.memory_space<vmem>>, vector<1x256xf32>
      %c3 = arith.constant 3 : index
      %c0_17 = arith.constant 0 : index
      %32 = vector.load %arg6[%c3, %c0_17] : memref<16x256xf32, #tpu.memory_space<vmem>>, vector<1x256xf32>
      tpu.vector_store %arg6[%c3, %c0_17], %31 {strides = array<i32>} : memref<16x256xf32, #tpu.memory_space<vmem>>, vector<1x256xf32>,
      %c4_i32 = arith.constant 4 : i32
      %33 = arith.addi %8, %c4_i32 : i32
      %34 = arith.index_cast %33 : i32 to index
      %35 = memref.load %arg2[%34] : memref<32xi32, #tpu.memory_space<smem>>
      %36 = arith.index_cast %35 : i32 to index
      %c0_18 = arith.constant 0 : index
      %37 = vector.load %arg4[%36, %c0_18] : memref<64x256xf32, #tpu.memory_space<vmem>>, vector<1x256xf32>
      %c4 = arith.constant 4 : index
      %c0_19 = arith.constant 0 : index
      %38 = vector.load %arg6[%c4, %c0_19] : memref<16x256xf32, #tpu.memory_space<vmem>>, vector<1x256xf32>
      tpu.vector_store %arg6[%c4, %c0_19], %37 {strides = array<i32>} : memref<16x256xf32, #tpu.memory_space<vmem>>, vector<1x256xf32>,
      %c5_i32 = arith.constant 5 : i32
      %39 = arith.addi %8, %c5_i32 : i32
      %40 = arith.index_cast %39 : i32 to index
      %41 = memref.load %arg2[%40] : memref<32xi32, #tpu.memory_space<smem>>
      %42 = arith.index_cast %41 : i32 to index
      %c0_20 = arith.constant 0 : index
      %43 = vector.load %arg4[%42, %c0_20] : memref<64x256xf32, #tpu.memory_space<vmem>>, vector<1x256xf32>
      %c5 = arith.constant 5 : index
      %c0_21 = arith.constant 0 : index
      %44 = vector.load %arg6[%c5, %c0_21] : memref<16x256xf32, #tpu.memory_space<vmem>>, vector<1x256xf32>
      tpu.vector_store %arg6[%c5, %c0_21], %43 {strides = array<i32>} : memref<16x256xf32, #tpu.memory_space<vmem>>, vector<1x256xf32>,
      %c6_i32 = arith.constant 6 : i32
      %45 = arith.addi %8, %c6_i32 : i32
      %46 = arith.index_cast %45 : i32 to index
      %47 = memref.load %arg2[%46] : memref<32xi32, #tpu.memory_space<smem>>
      %48 = arith.index_cast %47 : i32 to index
      %c0_22 = arith.constant 0 : index
      %49 = vector.load %arg4[%48, %c0_22] : memref<64x256xf32, #tpu.memory_space<vmem>>, vector<1x256xf32>
      %c6 = arith.constant 6 : index
      %c0_23 = arith.constant 0 : index
      %50 = vector.load %arg6[%c6, %c0_23] : memref<16x256xf32, #tpu.memory_space<vmem>>, vector<1x256xf32>
      tpu.vector_store %arg6[%c6, %c0_23], %49 {strides = array<i32>} : memref<16x256xf32, #tpu.memory_space<vmem>>, vector<1x256xf32>,
      %c7_i32 = arith.constant 7 : i32
      %51 = arith.addi %8, %c7_i32 : i32
      %52 = arith.index_cast %51 : i32 to index
      %53 = memref.load %arg2[%52] : memref<32xi32, #tpu.memory_space<smem>>
      %54 = arith.index_cast %53 : i32 to index
      %c0_24 = arith.constant 0 : index
      %55 = vector.load %arg4[%54, %c0_24] : memref<64x256xf32, #tpu.memory_space<vmem>>, vector<1x256xf32>
      %c7 = arith.constant 7 : index
      %c0_25 = arith.constant 0 : index
      %56 = vector.load %arg6[%c7, %c0_25] : memref<16x256xf32, #tpu.memory_space<vmem>>, vector<1x256xf32>
      tpu.vector_store %arg6[%c7, %c0_25], %55 {strides = array<i32>} : memref<16x256xf32, #tpu.memory_space<vmem>>, vector<1x256xf32>,
      %c8_i32 = arith.constant 8 : i32
      %57 = arith.addi %8, %c8_i32 : i32
      %58 = arith.index_cast %57 : i32 to index
      %59 = memref.load %arg2[%58] : memref<32xi32, #tpu.memory_space<smem>>
      %60 = arith.index_cast %59 : i32 to index
      %c0_26 = arith.constant 0 : index
      %61 = vector.load %arg4[%60, %c0_26] : memref<64x256xf32, #tpu.memory_space<vmem>>, vector<1x256xf32>
      %c8 = arith.constant 8 : index
      %c0_27 = arith.constant 0 : index
      %62 = vector.load %arg6[%c8, %c0_27] : memref<16x256xf32, #tpu.memory_space<vmem>>, vector<1x256xf32>
      tpu.vector_store %arg6[%c8, %c0_27], %61 {strides = array<i32>} : memref<16x256xf32, #tpu.memory_space<vmem>>, vector<1x256xf32>,
      %c9_i32 = arith.constant 9 : i32
      %63 = arith.addi %8, %c9_i32 : i32
      %64 = arith.index_cast %63 : i32 to index
      %65 = memref.load %arg2[%64] : memref<32xi32, #tpu.memory_space<smem>>
      %66 = arith.index_cast %65 : i32 to index
      %c0_28 = arith.constant 0 : index
      %67 = vector.load %arg4[%66, %c0_28] : memref<64x256xf32, #tpu.memory_space<vmem>>, vector<1x256xf32>
      %c9 = arith.constant 9 : index
      %c0_29 = arith.constant 0 : index
      %68 = vector.load %arg6[%c9, %c0_29] : memref<16x256xf32, #tpu.memory_space<vmem>>, vector<1x256xf32>
      tpu.vector_store %arg6[%c9, %c0_29], %67 {strides = array<i32>} : memref<16x256xf32, #tpu.memory_space<vmem>>, vector<1x256xf32>,
      %c10_i32 = arith.constant 10 : i32
      %69 = arith.addi %8, %c10_i32 : i32
      %70 = arith.index_cast %69 : i32 to index
      %71 = memref.load %arg2[%70] : memref<32xi32, #tpu.memory_space<smem>>
      %72 = arith.index_cast %71 : i32 to index
      %c0_30 = arith.constant 0 : index
      %73 = vector.load %arg4[%72, %c0_30] : memref<64x256xf32, #tpu.memory_space<vmem>>, vector<1x256xf32>
      %c10 = arith.constant 10 : index
      %c0_31 = arith.constant 0 : index
      %74 = vector.load %arg6[%c10, %c0_31] : memref<16x256xf32, #tpu.memory_space<vmem>>, vector<1x256xf32>
      tpu.vector_store %arg6[%c10, %c0_31], %73 {strides = array<i32>} : memref<16x256xf32, #tpu.memory_space<vmem>>, vector<1x256xf32>,
      %c11_i32 = arith.constant 11 : i32
      %75 = arith.addi %8, %c11_i32 : i32
      %76 = arith.index_cast %75 : i32 to index
      %77 = memref.load %arg2[%76] : memref<32xi32, #tpu.memory_space<smem>>
      %78 = arith.index_cast %77 : i32 to index
      %c0_32 = arith.constant 0 : index
      %79 = vector.load %arg4[%78, %c0_32] : memref<64x256xf32, #tpu.memory_space<vmem>>, vector<1x256xf32>
      %c11 = arith.constant 11 : index
      %c0_33 = arith.constant 0 : index
      %80 = vector.load %arg6[%c11, %c0_33] : memref<16x256xf32, #tpu.memory_space<vmem>>, vector<1x256xf32>
      tpu.vector_store %arg6[%c11, %c0_33], %79 {strides = array<i32>} : memref<16x256xf32, #tpu.memory_space<vmem>>, vector<1x256xf32>,
      %c12_i32 = arith.constant 12 : i32
      %81 = arith.addi %8, %c12_i32 : i32
      %82 = arith.index_cast %81 : i32 to index
      %83 = memref.load %arg2[%82] : memref<32xi32, #tpu.memory_space<smem>>
      %84 = arith.index_cast %83 : i32 to index
      %c0_34 = arith.constant 0 : index
      %85 = vector.load %arg4[%84, %c0_34] : memref<64x256xf32, #tpu.memory_space<vmem>>, vector<1x256xf32>
      %c12 = arith.constant 12 : index
      %c0_35 = arith.constant 0 : index
      %86 = vector.load %arg6[%c12, %c0_35] : memref<16x256xf32, #tpu.memory_space<vmem>>, vector<1x256xf32>
      tpu.vector_store %arg6[%c12, %c0_35], %85 {strides = array<i32>} : memref<16x256xf32, #tpu.memory_space<vmem>>, vector<1x256xf32>,
      %c13_i32 = arith.constant 13 : i32
      %87 = arith.addi %8, %c13_i32 : i32
      %88 = arith.index_cast %87 : i32 to index
      %89 = memref.load %arg2[%88] : memref<32xi32, #tpu.memory_space<smem>>
      %90 = arith.index_cast %89 : i32 to index
      %c0_36 = arith.constant 0 : index
      %91 = vector.load %arg4[%90, %c0_36] : memref<64x256xf32, #tpu.memory_space<vmem>>, vector<1x256xf32>
      %c13 = arith.constant 13 : index
      %c0_37 = arith.constant 0 : index
      %92 = vector.load %arg6[%c13, %c0_37] : memref<16x256xf32, #tpu.memory_space<vmem>>, vector<1x256xf32>
      tpu.vector_store %arg6[%c13, %c0_37], %91 {strides = array<i32>} : memref<16x256xf32, #tpu.memory_space<vmem>>, vector<1x256xf32>,
      %c14_i32 = arith.constant 14 : i32
      %93 = arith.addi %8, %c14_i32 : i32
      %94 = arith.index_cast %93 : i32 to index
      %95 = memref.load %arg2[%94] : memref<32xi32, #tpu.memory_space<smem>>
      %96 = arith.index_cast %95 : i32 to index
      %c0_38 = arith.constant 0 : index
      %97 = vector.load %arg4[%96, %c0_38] : memref<64x256xf32, #tpu.memory_space<vmem>>, vector<1x256xf32>
      %c14 = arith.constant 14 : index
      %c0_39 = arith.constant 0 : index
      %98 = vector.load %arg6[%c14, %c0_39] : memref<16x256xf32, #tpu.memory_space<vmem>>, vector<1x256xf32>
      tpu.vector_store %arg6[%c14, %c0_39], %97 {strides = array<i32>} : memref<16x256xf32, #tpu.memory_space<vmem>>, vector<1x256xf32>,
      %c15_i32 = arith.constant 15 : i32
      %99 = arith.addi %8, %c15_i32 : i32
      %100 = arith.index_cast %99 : i32 to index
      %101 = memref.load %arg2[%100] : memref<32xi32, #tpu.memory_space<smem>>
      %102 = arith.index_cast %101 : i32 to index
      %c0_40 = arith.constant 0 : index
      %103 = vector.load %arg4[%102, %c0_40] : memref<64x256xf32, #tpu.memory_space<vmem>>, vector<1x256xf32>
      %c15 = arith.constant 15 : index
      %c0_41 = arith.constant 0 : index
      %104 = vector.load %arg6[%c15, %c0_41] : memref<16x256xf32, #tpu.memory_space<vmem>>, vector<1x256xf32>
      tpu.vector_store %arg6[%c15, %c0_41], %103 {strides = array<i32>} : memref<16x256xf32, #tpu.memory_space<vmem>>, vector<1x256xf32>,
    } else {
    }
    %c0 = arith.constant 0 : index
    %c0_1 = arith.constant 0 : index
    %c0_2 = arith.constant 0 : index
    %3 = vector.load %arg3[%c0, %c0_1, %c0_2] : memref<1x16x256xf32, #tpu.memory_space<vmem>>, vector<1x16x256xf32>
    %c0_3 = arith.constant 0 : index
    %c0_4 = arith.constant 0 : index
    %4 = vector.load %arg6[%c0_3, %c0_4] : memref<16x256xf32, #tpu.memory_space<vmem>>, vector<16x256xf32>
    %5 = vector.shape_cast %4 : vector<16x256xf32> to vector<1x16x256xf32>
    %6 = arith.addf %3, %5 : vector<1x16x256xf32>
    %c0_5 = arith.constant 0 : index
    %c0_6 = arith.constant 0 : index
    %c0_7 = arith.constant 0 : index
    %7 = vector.load %arg5[%c0_5, %c0_6, %c0_7] : memref<1x16x256xf32, #tpu.memory_space<vmem>>, vector<1x16x256xf32>
    tpu.vector_store %arg5[%c0_5, %c0_6, %c0_7], %6 {strides = array<i32>} : memref<1x16x256xf32, #tpu.memory_space<vmem>>, vector<1x16x256xf32>,
    return
  }
  func.func @transform_0(%arg0: i32, %arg1: i32, %arg2: memref<32xi32, #tpu.memory_space<smem>>) -> (i32, i32, i32) {
    %c0_i32 = arith.constant 0 : i32
    %c0_i32_0 = arith.constant 0 : i32
    return %arg1, %arg0, %c0_i32 : i32, i32, i32
  }
  func.func @transform_1(%arg0: i32, %arg1: i32, %arg2: memref<32xi32, #tpu.memory_space<smem>>) -> (i32, i32) {
    %c0_i32 = arith.constant 0 : i32
    %c0_i32_0 = arith.constant 0 : i32
    %c0_i32_1 = arith.constant 0 : i32
    return %c0_i32, %c0_i32_0 : i32, i32
  }
  func.func @transform_2(%arg0: i32, %arg1: i32, %arg2: memref<32xi32, #tpu.memory_space<smem>>) -> (i32, i32, i32) {
    %c0_i32 = arith.constant 0 : i32
    %c0_i32_0 = arith.constant 0 : i32
    return %arg1, %arg0, %c0_i32 : i32, i32, i32
  }
}

</mosaic_0001>

<llo_original>
// kernel: tpu_custom_call.1
$region0: #{tpu_custom_call.1}
  #allocation0 [shape = 'u32[]', space=smem, size = 0x4, offset = 0x4, fixed_abs, tag = 'smem constant byte address 0x4 - core index']
  #allocation1 [shape = 'u32[144,128]{1,0:T(1,128)}', space=vmem, size = 0x12000, scoped, tag = 'internal scratch']
  #allocation2 [shape = 'f32[16,256]{1,0:T(8,128)}', space=vmem, size = 0x4000, scoped, tag = 'scratch operand']
  #allocation3 [shape = 's32[1]{0}', space=sflag, size = 0x4, scoped, tag = 'scoped memory for tpu_custom_call.1']
  #allocation4 [shape = 'u8[512]{0}', space=smem, size = 0x200, scoped, tag = 'prefetched SMEM operand 0']
  %s0 = inlined_call_operand.hbm [shape: s32[32], index: 0, kind: input, shape index: {}]
  %s1 = inlined_call_operand.hbm [shape: f32[2,32,256], index: 1, kind: input, shape index: {}]
  %s2 = inlined_call_operand.hbm [shape: f32[64,256], index: 2, kind: input, shape index: {}]
  %s3 = inlined_call_operand.hbm [shape: f32[2,32,256], index: 3, kind: output, shape index: {}]
  %s4 = sld [smem:[#allocation0]]
  $region53: #{tpu_custom_call.1} parent=0
    _
  %s6 = ssub.s32 1, %s4
  %s7 = scalar_select 0, %s6, %s4
  %9 = dma.hbm_to_smem %s0, 16, [#allocation4], [#allocation3]
  %10 = dma.done [#allocation3], 16
  %11 = sfence
  $region1: #{tpu_custom_call.1} parent=0
    #allocation5 [shape = 'u8[32768]{0}', space=vmem, size = 0x8000, scoped, tag = 'input window, operand 1']
    #allocation6 [shape = 's32[2]{0}', space=sflag, size = 0x8, scoped, tag = 'scoped memory for tpu_custom_call.1']
    #allocation7 [shape = 's32[2]{0}', space=sflag, size = 0x8, scoped, tag = 'scoped memory for tpu_custom_call.1']
    #allocation8 [shape = 'u8[65536]{0}', space=vmem, size = 0x10000, scoped, tag = 'input window, operand 2, single buffered']
    #allocation9 [shape = 's32[1]{0}', space=sflag, size = 0x4, scoped, tag = 'scoped memory for tpu_custom_call.1']
    #allocation10 [shape = 'u8[32768]{0}', space=vmem, size = 0x8000, scoped, tag = 'output window, operand 0']
    %12 = vsyncpa [#allocation6], 0
    %s13 = scalar_lea.sflag [#allocation6], 1
    %14 = vsyncpa %s13, 0
    %15 = vsyncpa [#allocation9], 0
    %16 = vsyncpa [#allocation7], 0
    %s17 = scalar_lea.sflag [#allocation7], 1
    %18 = vsyncpa %s17, 0
    loop: start=0, step=1, limit=6
    $region2: #{tpu_custom_call.1} parent=1 // loop_pre_header
      _
    $region3: #{tpu_custom_call.1} parent=1 // loop_header
      %s20 = sphi 0, %s24
      %p21 = scmp.ge.s32.totalorder %s20, 6
      %s27 = sphi 0, %s39
      %s28 = sphi 0, %s35
      %s29 = sphi 0, %s27
      %s30 = sphi 0, %s28
      %s31 = sphi 0, %s29
      %s32 = sphi 0, %s30
      %s44 = sphi 0, %s46
      %s47 = sphi 0, %s44
      %s48 = sphi 0, %s47
      %s64 = sphi 0, %s48
      %s68 = sphi 0, %s68
      %s70 = sphi 0, %s68
      %s71 = sphi 0, %s70
      %s85 = sphi 0, %s71
      %s93 = sphi 0, %s95
      %s96 = sphi 0, %s93
      %s97 = sphi 0, %s96
      %s113 = sphi 0, %s97
    $region4: #{tpu_custom_call.1} parent=1 // loop_header_branch
      %23 = sbr.rel (%p21) target = $region8
    $region5: #{tpu_custom_call.1} parent=1 // loop_body
      %s25 = ssub.s32 %s20, 1
      %s26 = ssub.s32 %s20, 2
      %s33 = sadd.s32 1, %s28
      %p34 = scmp.ge.s32.totalorder %s33, 2
      %s35 = scalar_select %p34, 0, %s33
      %s36 = sadd.s32 1, %s27
      %s37 = scalar_select %p34, %s36, %s27
      %p38 = scmp.ge.s32.totalorder %s37, 2
      %s39 = scalar_select %p38, 0, %s37
      %s40 = ssub.s32 %s28, %s35
      %s41 = ssub.s32 %s27, %s39
      %s42 = sor.u32 %s40, %s41
      %p43 = scmp.eq.s32.totalorder %s42, 0
      %s45 = sadd.s32 %s44, 1
      %s46 = scalar_select %p43, %s44, %s45
      %p49 = pneg %p43
      %p50 = scmp.eq.s32.totalorder %s20, 3
      %p51 = por %p49, %p50
      %p52 = scmp.ne.s32.totalorder %s44, %s47
      %p53 = scmp.eq.s32.totalorder %s20, 0
      %p54 = por %p52, %p53
      %p55 = scmp.ne.s32.totalorder %s44, %s47
      %p56 = scmp.eq.s32.totalorder %s25, 3
      %p57 = por %p55, %p56
      %p58 = scmp.ne.s32.totalorder %s47, %s48
      %p59 = scmp.eq.s32.totalorder %s25, 0
      %p60 = por %p58, %p59
      %p61 = scmp.ne.s32.totalorder %s47, %s48
      %p62 = scmp.eq.s32.totalorder %s26, 3
      %p63 = por %p61, %p62
      %p65 = scmp.ne.s32.totalorder %s48, %s64
      %p66 = scmp.eq.s32.totalorder %s26, 0
      %p67 = por %p65, %p66
      %s69 = sadd.s32 %s68, 1
      %p72 = scmp.eq.s32.totalorder %s20, 3
      %p73 = scmp.ne.s32.totalorder %s68, %s70
      %p74 = scmp.eq.s32.totalorder %s20, 0
      %p75 = por %p73, %p74
      %p76 = scmp.ne.s32.totalorder %s68, %s70
      %p77 = scmp.eq.s32.totalorder %s25, 3
      %p78 = por %p76, %p77
      %p79 = scmp.ne.s32.totalorder %s70, %s71
      %p80 = scmp.eq.s32.totalorder %s25, 0
      %p81 = por %p79, %p80
      %p82 = scmp.ne.s32.totalorder %s70, %s71
      %p83 = scmp.eq.s32.totalorder %s26, 3
      %p84 = por %p82, %p83
      %p86 = scmp.ne.s32.totalorder %s71, %s85
      %p87 = scmp.eq.s32.totalorder %s26, 0
      %p88 = por %p86, %p87
      %s89 = ssub.s32 %s28, %s35
      %s90 = ssub.s32 %s27, %s39
      %s91 = sor.u32 %s89, %s90
      %p92 = scmp.eq.s32.totalorder %s91, 0
      %s94 = sadd.s32 %s93, 1
      %s95 = scalar_select %p92, %s93, %s94
      %p98 = pneg %p92
      %p99 = scmp.eq.s32.totalorder %s20, 3
      %p100 = por %p98, %p99
      %p101 = scmp.ne.s32.totalorder %s93, %s96
      %p102 = scmp.eq.s32.totalorder %s20, 0
      %p103 = por %p101, %p102
      %p104 = scmp.ne.s32.totalorder %s93, %s96
      %p105 = scmp.eq.s32.totalorder %s25, 3
      %p106 = por %p104, %p105
      %p107 = scmp.ne.s32.totalorder %s96, %s97
      %p108 = scmp.eq.s32.totalorder %s25, 0
      %p109 = por %p107, %p108
      %p110 = scmp.ne.s32.totalorder %s96, %s97
      %p111 = scmp.eq.s32.totalorder %s26, 3
      %p112 = por %p110, %p111
      %p114 = scmp.ne.s32.totalorder %s97, %s113
      %p115 = scmp.eq.s32.totalorder %s26, 0
      %p116 = por %p114, %p115
      %p117 = scmp.le.s32.totalorder 1, %s20
      %p118 = scmp.lt.s32.totalorder %s20, 5
      %p119 = pnand %p117, %p118
      %p120 = pneg %p119
      // Predicated region
      $region9: #{tpu_custom_call.1} parent=5 // pred_check
        _
      $region10: #{tpu_custom_call.1} parent=5 // pred_check_branch
        %122 = sbr.rel (%p119) target = $region12
      $region11: #{tpu_custom_call.1} parent=5 // pred_region
        %s123 = ssub.s32 %s20, 1
        // Predicated region
        $region13: #{tpu_custom_call.1} parent=11 // pred_check
          %p124 = pneg %p81
        $region14: #{tpu_custom_call.1} parent=11 // pred_check_branch
          %126 = sbr.rel (%p124) target = $region16
        $region15: #{tpu_custom_call.1} parent=11 // pred_region
          %s128 = ssub.s32 2048, 2048
          %129 = vsyncadd [#allocation9], %s128
          %s130 = sshll.u32 [#allocation8], 4
          %s131 = int_to_ptr.vmem [resolvable:$true] %s130
          %136 = dma.hbm_to_vmem [thread:$0]  %s2, 2048, %s131, [#allocation9], 256, 256, 16
        $region16: #{tpu_custom_call.1} parent=11 // pred_fallthru
          _
      $region12: #{tpu_custom_call.1} parent=5 // pred_fallthru
        _
      %p137 = scmp.lt.s32.totalorder %s20, 4
      // Predicated region
      $region17: #{tpu_custom_call.1} parent=5 // pred_check
        %p138 = pneg %p137
      $region18: #{tpu_custom_call.1} parent=5 // pred_check_branch
        %140 = sbr.rel (%p138) target = $region20
      $region19: #{tpu_custom_call.1} parent=5 // pred_region
        // Predicated region
        $region21: #{tpu_custom_call.1} parent=19 // pred_check
          %p141 = pneg %p54
        $region22: #{tpu_custom_call.1} parent=19 // pred_check_branch
          %143 = sbr.rel (%p141) target = $region24
        $region23: #{tpu_custom_call.1} parent=19 // pred_region
          %s144 = sand.u32 %s44, 1
          %s145 = scalar_lea.sflag [#allocation6], %s144
          %s146 = sand.u32 %s44, 1
          %s147 = smul.addr %s146, 32
          %s148 = scalar_lea.vmem [#allocation5], %s147
          %s149 = smul.u32 2, %s27
          %s151 = ssub.s32 512, 512
          %152 = vsyncadd %s145, %s151
          %s153 = smul.addr %s149, 2
          %s154 = smul.addr %s28, 8
          %s155 = sadd.s32 %s153, %s154
          %s156 = smul.addr %s155, 128
          %s157 = scalar_lea.hbm %s1, %s156
          %s158 = sshll.u32 %s148, 4
          %s159 = int_to_ptr.vmem [resolvable:$true] %s158
          %164 = dma.hbm_to_vmem [thread:$0]  %s157, 512, %s159, %s145, 256, 256, 16
        $region24: #{tpu_custom_call.1} parent=19 // pred_fallthru
          _
      $region20: #{tpu_custom_call.1} parent=5 // pred_fallthru
        _
      %p165 = scmp.le.s32.totalorder 1, %s20
      %p166 = scmp.lt.s32.totalorder %s20, 5
      %p167 = pnand %p165, %p166
      %p168 = pneg %p167
      // Predicated region
      $region25: #{tpu_custom_call.1} parent=5 // pred_check
        _
      $region26: #{tpu_custom_call.1} parent=5 // pred_check_branch
        %170 = sbr.rel (%p167) target = $region28
      $region27: #{tpu_custom_call.1} parent=5 // pred_region
        %s171 = ssub.s32 %s20, 1
        %s172 = sand.u32 %s47, 1
        %s173 = scalar_lea.sflag [#allocation6], %s172
        %s174 = sand.u32 %s47, 1
        %s175 = smul.addr %s174, 32
        %s176 = scalar_lea.vmem [#allocation5], %s175
        // Predicated region
        $region29: #{tpu_custom_call.1} parent=27 // pred_check
          %p177 = pneg %p60
        $region30: #{tpu_custom_call.1} parent=27 // pred_check_branch
          %179 = sbr.rel (%p177) target = $region32
        $region31: #{tpu_custom_call.1} parent=27 // pred_region
          %180 = dma.done %s173, 512
        $region32: #{tpu_custom_call.1} parent=27 // pred_fallthru
          _
        // Predicated region
        $region33: #{tpu_custom_call.1} parent=27 // pred_check
          %p181 = pneg %p81
        $region34: #{tpu_custom_call.1} parent=27 // pred_check_branch
          %183 = sbr.rel (%p181) target = $region36
        $region35: #{tpu_custom_call.1} parent=27 // pred_region
          %184 = dma.done [#allocation9], 2048
        $region36: #{tpu_custom_call.1} parent=27 // pred_fallthru
          _
        %s185 = sand.u32 %s47, 1
        %s186 = scalar_lea.sflag [#allocation6], %s185
        %s187 = sand.u32 %s47, 1
        %s188 = smul.addr %s187, 32
        %s189 = scalar_lea.vmem [#allocation5], %s188
        %p190 = pneg %p60
        %p191 = pneg %p57
        %p192 = pneg %p81
        %p193 = pneg %p78
        %p194 = pneg %p109
        %p195 = pneg %p106
        %s196 = sand.u32 %s96, 1
        %s197 = scalar_lea.sflag [#allocation7], %s196
        %s198 = sand.u32 %s96, 1
        %s199 = smul.addr %s198, 32
        %s200 = scalar_lea.vmem [#allocation10], %s199
        %s201 = smul.u32 2, %s29
        %s202 = smul.u32 2, %s29
        %p203 = scmp.eq.s32.totalorder %s30, 0
        // Predicated region
        $region37: #{tpu_custom_call.1} parent=27 // pred_check
          %p204 = pneg %p203
        $region38: #{tpu_custom_call.1} parent=27 // pred_check_branch
          %206 = sbr.rel (%p204) target = $region40
        $region39: #{tpu_custom_call.1} parent=27 // pred_region
          %s207 = smul.u32 %s29, 16
          %s208 = sld [smem:[#allocation4 + %s207]]
          %s209 = sshra.s32 %s208, 3
          %s210 = sand.u32 %s208, 7
          %s211 = sshra.s32 %s208, 3
          %s212 = sand.u32 %s208, 7
          %s213 = smul.u32 %s209, 2
          %s214 = smul.u32 %s213, 8
          %s215 = sadd.s32 %s214, %s212
          %s216 = scalar_lea.vmem [#allocation8], %s215
          %v217 = vld [vmem:[%s216] ss:$8 sm:$0x3]
          %v218 = vlaneseq
          %vm219 = vcmp.ge.s32.totalorder %v218, 0
          %vm220 = vcmp.lt.s32.totalorder %v218, 256
          %vm221 = vmand %vm219, %vm220
          %222 = vst.msk [vmem:[#allocation2] ss:$8 sm:$0x3] %vm221, %v217
          %223 = vst.msk [vmem:[#allocation2] ss:$8 sm:$0x0] %vm221, %v217
          %s224 = sadd.s32 %s207, 1
          %s225 = sld [smem:[#allocation4 + %s224]]
          %s226 = sshra.s32 %s225, 3
          %s227 = sand.u32 %s225, 7
          %s228 = sshra.s32 %s225, 3
          %s229 = sand.u32 %s225, 7
          %s230 = smul.u32 %s226, 2
          %s231 = smul.u32 %s230, 8
          %s232 = sadd.s32 %s231, %s229
          %s233 = scalar_lea.vmem [#allocation8], %s232
          %v234 = vld [vmem:[%s233] ss:$8 sm:$0x3]
          %s235 = scalar_lea.vmem [#allocation2], 1
          %236 = vst.msk [vmem:[%s235] ss:$8 sm:$0x3] %vm221, %v234
          %237 = vst.msk [vmem:[%s235] ss:$8 sm:$0x0] %vm221, %v234
          %s238 = sadd.s32 %s207, 2
          %s239 = sld [smem:[#allocation4 + %s238]]
          %s240 = sshra.s32 %s239, 3
          %s241 = sand.u32 %s239, 7
          %s242 = sshra.s32 %s239, 3
          %s243 = sand.u32 %s239, 7
          %s244 = smul.u32 %s240, 2
          %s245 = smul.u32 %s244, 8
          %s246 = sadd.s32 %s245, %s243
          %s247 = scalar_lea.vmem [#allocation8], %s246
          %v248 = vld [vmem:[%s247] ss:$8 sm:$0x3]
          %s249 = scalar_lea.vmem [#allocation2], 2
          %250 = vst.msk [vmem:[%s249] ss:$8 sm:$0x3] %vm221, %v248
          %251 = vst.msk [vmem:[%s249] ss:$8 sm:$0x0] %vm221, %v248
          %s252 = sadd.s32 %s207, 3
          %s253 = sld [smem:[#allocation4 + %s252]]
          %s254 = sshra.s32 %s253, 3
          %s255 = sand.u32 %s253, 7
          %s256 = sshra.s32 %s253, 3
          %s257 = sand.u32 %s253, 7
          %s258 = smul.u32 %s254, 2
          %s259 = smul.u32 %s258, 8
          %s260 = sadd.s32 %s259, %s257
          %s261 = scalar_lea.vmem [#allocation8], %s260
          %v262 = vld [vmem:[%s261] ss:$8 sm:$0x3]
          %s263 = scalar_lea.vmem [#allocation2], 3
          %264 = vst.msk [vmem:[%s263] ss:$8 sm:$0x3] %vm221, %v262
          %265 = vst.msk [vmem:[%s263] ss:$8 sm:$0x0] %vm221, %v262
          %s266 = sadd.s32 %s207, 4
          %s267 = sld [smem:[#allocation4 + %s266]]
          %s268 = sshra.s32 %s267, 3
          %s269 = sand.u32 %s267, 7
          %s270 = sshra.s32 %s267, 3
          %s271 = sand.u32 %s267, 7
          %s272 = smul.u32 %s268, 2
          %s273 = smul.u32 %s272, 8
          %s274 = sadd.s32 %s273, %s271
          %s275 = scalar_lea.vmem [#allocation8], %s274
          %v276 = vld [vmem:[%s275] ss:$8 sm:$0x3]
          %s277 = scalar_lea.vmem [#allocation2], 4
          %278 = vst.msk [vmem:[%s277] ss:$8 sm:$0x3] %vm221, %v276
          %279 = vst.msk [vmem:[%s277] ss:$8 sm:$0x0] %vm221, %v276
          %s280 = sadd.s32 %s207, 5
          %s281 = sld [smem:[#allocation4 + %s280]]
          %s282 = sshra.s32 %s281, 3
          %s283 = sand.u32 %s281, 7
          %s284 = sshra.s32 %s281, 3
          %s285 = sand.u32 %s281, 7
          %s286 = smul.u32 %s282, 2
          %s287 = smul.u32 %s286, 8
          %s288 = sadd.s32 %s287, %s285
          %s289 = scalar_lea.vmem [#allocation8], %s288
          %v290 = vld [vmem:[%s289] ss:$8 sm:$0x3]
          %s291 = scalar_lea.vmem [#allocation2], 5
          %292 = vst.msk [vmem:[%s291] ss:$8 sm:$0x3] %vm221, %v290
          %293 = vst.msk [vmem:[%s291] ss:$8 sm:$0x0] %vm221, %v290
          %s294 = sadd.s32 %s207, 6
          %s295 = sld [smem:[#allocation4 + %s294]]
          %s296 = sshra.s32 %s295, 3
          %s297 = sand.u32 %s295, 7
          %s298 = sshra.s32 %s295, 3
          %s299 = sand.u32 %s295, 7
          %s300 = smul.u32 %s296, 2
          %s301 = smul.u32 %s300, 8
          %s302 = sadd.s32 %s301, %s299
          %s303 = scalar_lea.vmem [#allocation8], %s302
          %v304 = vld [vmem:[%s303] ss:$8 sm:$0x3]
          %s305 = scalar_lea.vmem [#allocation2], 6
          %306 = vst.msk [vmem:[%s305] ss:$8 sm:$0x3] %vm221, %v304
          %307 = vst.msk [vmem:[%s305] ss:$8 sm:$0x0] %vm221, %v304
          %s308 = sadd.s32 %s207, 7
          %s309 = sld [smem:[#allocation4 + %s308]]
          %s310 = sshra.s32 %s309, 3
          %s311 = sand.u32 %s309, 7
          %s312 = sshra.s32 %s309, 3
          %s313 = sand.u32 %s309, 7
          %s314 = smul.u32 %s310, 2
          %s315 = smul.u32 %s314, 8
          %s316 = sadd.s32 %s315, %s313
          %s317 = scalar_lea.vmem [#allocation8], %s316
          %v318 = vld [vmem:[%s317] ss:$8 sm:$0x3]
          %s319 = scalar_lea.vmem [#allocation2], 7
          %320 = vst.msk [vmem:[%s319] ss:$8 sm:$0x3] %vm221, %v318
          %321 = vst.msk [vmem:[%s319] ss:$8 sm:$0x0] %vm221, %v318
          %s322 = sadd.s32 %s207, 8
          %s323 = sld [smem:[#allocation4 + %s322]]
          %s324 = sshra.s32 %s323, 3
          %s325 = sand.u32 %s323, 7
          %s326 = sshra.s32 %s323, 3
          %s327 = sand.u32 %s323, 7
          %s328 = smul.u32 %s324, 2
          %s329 = smul.u32 %s328, 8
          %s330 = sadd.s32 %s329, %s327
          %s331 = scalar_lea.vmem [#allocation8], %s330
          %v332 = vld [vmem:[%s331] ss:$8 sm:$0x3]
          %s333 = scalar_lea.vmem [#allocation2], 16
          %334 = vst.msk [vmem:[%s333] ss:$8 sm:$0x3] %vm221, %v332
          %335 = vst.msk [vmem:[%s333] ss:$8 sm:$0x0] %vm221, %v332
          %s336 = sadd.s32 %s207, 9
          %s337 = sld [smem:[#allocation4 + %s336]]
          %s338 = sshra.s32 %s337, 3
          %s339 = sand.u32 %s337, 7
          %s340 = sshra.s32 %s337, 3
          %s341 = sand.u32 %s337, 7
          %s342 = smul.u32 %s338, 2
          %s343 = smul.u32 %s342, 8
          %s344 = sadd.s32 %s343, %s341
          %s345 = scalar_lea.vmem [#allocation8], %s344
          %v346 = vld [vmem:[%s345] ss:$8 sm:$0x3]
          %s347 = scalar_lea.vmem [#allocation2], 17
          %348 = vst.msk [vmem:[%s347] ss:$8 sm:$0x3] %vm221, %v346
          %349 = vst.msk [vmem:[%s347] ss:$8 sm:$0x0] %vm221, %v346
          %s350 = sadd.s32 %s207, 10
          %s351 = sld [smem:[#allocation4 + %s350]]
          %s352 = sshra.s32 %s351, 3
          %s353 = sand.u32 %s351, 7
          %s354 = sshra.s32 %s351, 3
          %s355 = sand.u32 %s351, 7
          %s356 = smul.u32 %s352, 2
          %s357 = smul.u32 %s356, 8
          %s358 = sadd.s32 %s357, %s355
          %s359 = scalar_lea.vmem [#allocation8], %s358
          %v360 = vld [vmem:[%s359] ss:$8 sm:$0x3]
          %s361 = scalar_lea.vmem [#allocation2], 18
          %362 = vst.msk [vmem:[%s361] ss:$8 sm:$0x3] %vm221, %v360
          %363 = vst.msk [vmem:[%s361] ss:$8 sm:$0x0] %vm221, %v360
          %s364 = sadd.s32 %s207, 11
          %s365 = sld [smem:[#allocation4 + %s364]]
          %s366 = sshra.s32 %s365, 3
          %s367 = sand.u32 %s365, 7
          %s368 = sshra.s32 %s365, 3
          %s369 = sand.u32 %s365, 7
          %s370 = smul.u32 %s366, 2
          %s371 = smul.u32 %s370, 8
          %s372 = sadd.s32 %s371, %s369
          %s373 = scalar_lea.vmem [#allocation8], %s372
          %v374 = vld [vmem:[%s373] ss:$8 sm:$0x3]
          %s375 = scalar_lea.vmem [#allocation2], 19
          %376 = vst.msk [vmem:[%s375] ss:$8 sm:$0x3] %vm221, %v374
          %377 = vst.msk [vmem:[%s375] ss:$8 sm:$0x0] %vm221, %v374
          %s378 = sadd.s32 %s207, 12
          %s379 = sld [smem:[#allocation4 + %s378]]
          %s380 = sshra.s32 %s379, 3
          %s381 = sand.u32 %s379, 7
          %s382 = sshra.s32 %s379, 3
          %s383 = sand.u32 %s379, 7
          %s384 = smul.u32 %s380, 2
          %s385 = smul.u32 %s384, 8
          %s386 = sadd.s32 %s385, %s383
          %s387 = scalar_lea.vmem [#allocation8], %s386
          %v388 = vld [vmem:[%s387] ss:$8 sm:$0x3]
          %s389 = scalar_lea.vmem [#allocation2], 20
          %390 = vst.msk [vmem:[%s389] ss:$8 sm:$0x3] %vm221, %v388
          %391 = vst.msk [vmem:[%s389] ss:$8 sm:$0x0] %vm221, %v388
          %s392 = sadd.s32 %s207, 13
          %s393 = sld [smem:[#allocation4 + %s392]]
          %s394 = sshra.s32 %s393, 3
          %s395 = sand.u32 %s393, 7
          %s396 = sshra.s32 %s393, 3
          %s397 = sand.u32 %s393, 7
          %s398 = smul.u32 %s394, 2
          %s399 = smul.u32 %s398, 8
          %s400 = sadd.s32 %s399, %s397
          %s401 = scalar_lea.vmem [#allocation8], %s400
          %v402 = vld [vmem:[%s401] ss:$8 sm:$0x3]
          %s403 = scalar_lea.vmem [#allocation2], 21
          %404 = vst.msk [vmem:[%s403] ss:$8 sm:$0x3] %vm221, %v402
          %405 = vst.msk [vmem:[%s403] ss:$8 sm:$0x0] %vm221, %v402
          %s406 = sadd.s32 %s207, 14
          %s407 = sld [smem:[#allocation4 + %s406]]
          %s408 = sshra.s32 %s407, 3
          %s409 = sand.u32 %s407, 7
          %s410 = sshra.s32 %s407, 3
          %s411 = sand.u32 %s407, 7
          %s412 = smul.u32 %s408, 2
          %s413 = smul.u32 %s412, 8
          %s414 = sadd.s32 %s413, %s411
          %s415 = scalar_lea.vmem [#allocation8], %s414
          %v416 = vld [vmem:[%s415] ss:$8 sm:$0x3]
          %s417 = scalar_lea.vmem [#allocation2], 22
          %418 = vst.msk [vmem:[%s417] ss:$8 sm:$0x3] %vm221, %v416
          %419 = vst.msk [vmem:[%s417] ss:$8 sm:$0x0] %vm221, %v416
          %s420 = sadd.s32 %s207, 15
          %s421 = sld [smem:[#allocation4 + %s420]]
          %s422 = sshra.s32 %s421, 3
          %s423 = sand.u32 %s421, 7
          %s424 = sshra.s32 %s421, 3
          %s425 = sand.u32 %s421, 7
          %s426 = smul.u32 %s422, 2
          %s427 = smul.u32 %s426, 8
          %s428 = sadd.s32 %s427, %s425
          %s429 = scalar_lea.vmem [#allocation8], %s428
          %v430 = vld [vmem:[%s429] ss:$8 sm:$0x3]
          %s431 = scalar_lea.vmem [#allocation2], 23
          %432 = vst.msk [vmem:[%s431] ss:$8 sm:$0x3] %vm221, %v430
          %433 = vst.msk [vmem:[%s431] ss:$8 sm:$0x0] %vm221, %v430
        $region40: #{tpu_custom_call.1} parent=27 // pred_fallthru
          _
        %v434 = vld [vmem:[%s176] sm:$0xff]
        %v435 = vld [vmem:[%s176 + $0x8] sm:$0xff]
        %v436 = vld [vmem:[%s176 + $0x10] sm:$0xff]
        %v437 = vld [vmem:[%s176 + $0x18] sm:$0xff]
        %v438 = vld [vmem:[#allocation2] sm:$0xff]
        %v439 = vld [vmem:[#allocation2 + $0x8] sm:$0xff]
        %v440 = vld [vmem:[#allocation2 + $0x10] sm:$0xff]
        %v441 = vld [vmem:[#allocation2 + $0x18] sm:$0xff]
        %v442 = vadd.f32 %v434, %v438
        %v443 = vadd.f32 %v435, %v439
        %v444 = vadd.f32 %v436, %v440
        %v445 = vadd.f32 %v437, %v441
        %446 = vst [vmem:[%s200] sm:$0xff] %v442
        %447 = vst [vmem:[%s200 + $0x8] sm:$0xff] %v443
        %448 = vst [vmem:[%s200 + $0x10] sm:$0xff] %v444
        %449 = vst [vmem:[%s200 + $0x18] sm:$0xff] %v445
        %s450 = sand.u32 %s96, 1
        %s451 = scalar_lea.sflag [#allocation7], %s450
        %s452 = sand.u32 %s96, 1
        %s453 = smul.addr %s452, 32
        %s454 = scalar_lea.vmem [#allocation10], %s453
        // Predicated region
        $region41: #{tpu_custom_call.1} parent=27 // pred_check
          %p455 = pneg %p106
        $region42: #{tpu_custom_call.1} parent=27 // pred_check_branch
          %457 = sbr.rel (%p455) target = $region44
        $region43: #{tpu_custom_call.1} parent=27 // pred_region
          %s458 = smul.u32 2, %s29
          %s460 = ssub.s32 512, 512
          %461 = vsyncadd %s451, %s460
          %s462 = smul.addr %s458, 2
          %s463 = smul.addr %s30, 8
          %s464 = sadd.s32 %s462, %s463
          %s465 = smul.addr %s464, 128
          %s466 = scalar_lea.hbm %s3, %s465
          %s467 = sshll.u32 %s454, 4
          %s468 = int_to_ptr.vmem [resolvable:$true] %s467
          %473 = dma.vmem_to_hbm [thread:$0]  %s468, 512, %s466, %s451, 256, 256, 16
        $region44: #{tpu_custom_call.1} parent=27 // pred_fallthru
          _
      $region28: #{tpu_custom_call.1} parent=5 // pred_fallthru
        _
      %p474 = scmp.le.s32.totalorder 2, %s20
      // Predicated region
      $region45: #{tpu_custom_call.1} parent=5 // pred_check
        %p475 = pneg %p474
      $region46: #{tpu_custom_call.1} parent=5 // pred_check_branch
        %477 = sbr.rel (%p475) target = $region48
      $region47: #{tpu_custom_call.1} parent=5 // pred_region
        %s478 = ssub.s32 %s20, 2
        // Predicated region
        $region49: #{tpu_custom_call.1} parent=47 // pred_check
          %p479 = pneg %p112
        $region50: #{tpu_custom_call.1} parent=47 // pred_check_branch
          %481 = sbr.rel (%p479) target = $region52
        $region51: #{tpu_custom_call.1} parent=47 // pred_region
          %s482 = sand.u32 %s97, 1
          %s483 = scalar_lea.sflag [#allocation7], %s482
          %s484 = sand.u32 %s97, 1
          %s485 = smul.addr %s484, 32
          %s486 = scalar_lea.vmem [#allocation10], %s485
          %487 = dma.done %s483, 512
        $region52: #{tpu_custom_call.1} parent=47 // pred_fallthru
          _
      $region48: #{tpu_custom_call.1} parent=5 // pred_fallthru
        _
    $region6: #{tpu_custom_call.1} parent=1 // loop_footer
      %s24 = sadd.s32 1, %s20
    $region7: #{tpu_custom_call.1} parent=1 // loop_footer_branch
      %19 = sbr.rel target = $region3
    $region8: #{tpu_custom_call.1} parent=1 // loop_exit
      _
    %488 = vsyncpa [#allocation6], 1
    %s489 = scalar_lea.sflag [#allocation6], 1
    %490 = vsyncpa %s489, 1
    %491 = vsyncpa [#allocation9], 1
    %492 = vsyncpa [#allocation7], 1
    %s493 = scalar_lea.sflag [#allocation7], 1
    %494 = vsyncpa %s493, 1

</llo_original>
